<compile_context>
chip_gen: v6e
topology: v6e:2x2x1
jax: 0.10.0
libtpu: 0.0.40
codegen_flags: <defaults>
</compile_context>

<pallas_src>
import functools

import jax
import jax.numpy as jnp
import numpy as np
from jax.experimental import pallas as pl
from jax.experimental.pallas import tpu as pltpu

K = 5          # kernel size
PAD = 2        # padding
EPS = 1e-5     # BatchNorm eps


# ---------------------------------------------------------------------------
# Fused kernel: one batched conv matmul -> batch stats -> BN + ReLU.
# Everything (activation ~16 KB, stats) lives in VMEM / vregs for the call.
# ---------------------------------------------------------------------------
def _fused_conv_bn_relu_kernel(xw_ref, w_ref, fold_ref, gamma_ref, beta_ref,
                               o_ref, *, inv_count):
    # xw_ref   : (N*H, K*W*Cin)  bf16  row-window (dy) im2col'd, padded input
    # w_ref    : (K*W*Cin, W*Cout) bf16 banded conv weights, dy-stacked
    # fold_ref : (W*Cout, W*Cout) f32  F[l1,l2] = (l1 % Cout == l2 % Cout)
    # gamma/beta_ref : (1, W*Cout) f32, channel params pre-tiled onto lanes
    # o_ref    : (N*H, W*Cout)   f32   ReLU(BN(conv(x))), lane-dense
    # inv_count: 1 / (N*H*W), static

    # Whole-batch conv: ONE MXU matmul, f32 accumulation.
    y = jnp.dot(xw_ref[...], w_ref[...], preferred_element_type=jnp.float32)

    # Training-mode BN statistics (two-pass, biased variance), all f32.
    # fold_ref both folds lanes -> channels and re-broadcasts channels -> lanes.
    colsum = jnp.sum(y, axis=0, keepdims=True)                      # (1, WCout)
    mean_lane = jnp.dot(colsum, fold_ref[...],
                        preferred_element_type=jnp.float32) * inv_count
    d = y - mean_lane
    col_sqdev = jnp.sum(d * d, axis=0, keepdims=True)               # (1, WCout)
    var_lane = jnp.dot(col_sqdev, fold_ref[...],
                       preferred_element_type=jnp.float32) * inv_count

    scale = gamma_ref[...] * jax.lax.rsqrt(var_lane + EPS)          # (1, WCout)
    o_ref[...] = jnp.maximum(d * scale + beta_ref[...],
                             0.0).astype(o_ref.dtype)


# ---------------------------------------------------------------------------
# Banded (Toeplitz) conv weights, one band per dy:
#   band[dy][wi*Cin+ci, wo*Cout+co] = w[dy, wi-wo+PAD, ci, co]
# (zero outside 0 <= dx < K).  Column padding is folded in here.
# ---------------------------------------------------------------------------
def _banded_weight(w_oihw, W):
    Cout, Cin, _, _ = w_oihw.shape
    Wp = W + 2 * PAD
    w_kkic = jnp.transpose(w_oihw, (2, 3, 1, 0))        # (dy, dx, ci, co)
    bands = []
    for dy in range(K):
        w_flat = w_kkic[dy].reshape(K * Cin, Cout)      # rows: dx*Cin + ci
        cols = [jnp.pad(w_flat, ((wo * Cin, (Wp - K - wo) * Cin), (0, 0)))
                for wo in range(W)]                     # each (Wp*Cin, Cout)
        band_p = jnp.transpose(jnp.stack(cols, axis=0), (1, 0, 2))
        band_p = band_p.reshape(Wp * Cin, W * Cout)     # padded-column band
        bands.append(band_p[PAD * Cin:PAD * Cin + W * Cin, :])  # drop pad cols
    return jnp.stack(bands, axis=0)                     # (K, W*Cin, W*Cout)


# ---------------------------------------------------------------------------
# One-time parameter preparation (call once per weight update, NOT per forward).
# ---------------------------------------------------------------------------
def prepare_conv5x5_params(w_oihw, bias, gamma, beta, W):
    """Returns (w_full_bf16, fold_f32, gamma_lane, beta_lane) for conv5x5_apply.

    The conv bias is dropped: under training-mode BatchNorm it cancels exactly
    (shifts the batch mean identically, leaves the variance unchanged)."""
    del bias
    Cout, Cin = int(w_oihw.shape[0]), int(w_oihw.shape[1])

    w_band = _banded_weight(w_oihw.astype(jnp.float32), W)   # (K, W*Cin, W*Cout)
    w_full = w_band.reshape(K * W * Cin, W * Cout).astype(jnp.bfloat16)

    lanes = np.arange(W * Cout)
    fold = jnp.asarray(
        (lanes[:, None] % Cout == lanes[None, :] % Cout).astype(np.float32))

    gamma_lane = jnp.tile(gamma.reshape(1, Cout).astype(jnp.float32), (1, W))
    beta_lane = jnp.tile(beta.reshape(1, Cout).astype(jnp.float32), (1, W))
    return w_full, fold, gamma_lane, beta_lane


# ---------------------------------------------------------------------------
# Per-call forward: layout glue + single fused pallas_call.
# ---------------------------------------------------------------------------
@jax.jit
def conv5x5_apply(x_nchw, w_full, fold, gamma_lane, beta_lane):
    """ReLU(BatchNorm2d(Conv2d(x, 5x5, stride=1, pad=2))), training-mode BN
    (batch statistics, biased variance). Input/output layout: NCHW."""
    N, Cin, H, W = x_nchw.shape
    WCout = fold.shape[0]
    Cout = WCout // W
    KWCin = K * W * Cin

    # Layout glue (XLA side): NCHW -> row-flattened NHWC, pad rows, and
    # concatenate the K shifted row windows on the lane axis (im2col over dy;
    # the dx shifts are folded into the banded weights). bf16 matmul operands.
    x_rows = jnp.transpose(x_nchw, (0, 2, 3, 1)).reshape(N, H, W * Cin)
    x_pad = jnp.pad(x_rows, ((0, 0), (PAD, PAD), (0, 0)))
    x_win = jnp.concatenate([x_pad[:, dy:dy + H, :] for dy in range(K)],
                            axis=-1)                     # (N, H, K*W*Cin)
    x_win = x_win.reshape(N * H, KWCin).astype(jnp.bfloat16)

    kernel = functools.partial(_fused_conv_bn_relu_kernel,
                               inv_count=1.0 / float(N * H * W))

    out_flat = pl.pallas_call(
        kernel,
        out_shape=jax.ShapeDtypeStruct((N * H, WCout), jnp.float32),
        grid=(1,),
        in_specs=[
            pl.BlockSpec((N * H, KWCin), lambda i: (0, 0)),
            pl.BlockSpec((KWCin, WCout), lambda i: (0, 0)),
            pl.BlockSpec((WCout, WCout), lambda i: (0, 0)),
            pl.BlockSpec((1, WCout), lambda i: (0, 0)),
            pl.BlockSpec((1, WCout), lambda i: (0, 0)),
        ],
        out_specs=pl.BlockSpec((N * H, WCout), lambda i: (0, 0)),
        compiler_params=pltpu.CompilerParams(
            dimension_semantics=("arbitrary",)),
    )(x_win, w_full, fold, gamma_lane, beta_lane)

    # (N*H, W*Cout) -> NCHW.
    return jnp.transpose(out_flat.reshape(N, H, W, Cout), (0, 3, 1, 2))


def conv5x5_forward(x_nchw, w_oihw, bias, gamma, beta):
    """Convenience wrapper (re-prepares params every call; prefer the hoisted
    prepare_conv5x5_params + conv5x5_apply in real use)."""
    W = x_nchw.shape[3]
    params = prepare_conv5x5_params(w_oihw, bias, gamma, beta, W)
    return conv5x5_apply(x_nchw, *params)


# ---------------------------------------------------------------------------
# Pure-JAX reference (for a correctness sanity check).
# ---------------------------------------------------------------------------
def conv5x5_reference(x_nchw, w_oihw, bias, gamma, beta):
    y = jax.lax.conv_general_dilated(
        x_nchw, w_oihw, window_strides=(1, 1),
        padding=((PAD, PAD), (PAD, PAD)),
        dimension_numbers=("NCHW", "OIHW", "NCHW"))
    y = y + bias[None, :, None, None]
    mean = jnp.mean(y, axis=(0, 2, 3), keepdims=True)
    var = jnp.var(y, axis=(0, 2, 3), keepdims=True)     # biased, like BN train
    yhat = (y - mean) / jnp.sqrt(var + EPS)
    return jnp.maximum(yhat * gamma[None, :, None, None]
                       + beta[None, :, None, None], 0.0)


if __name__ == "__main__":
    # Small shapes consistent with the module: N=2, Cin=4, Cout=8, H=W=16.
    N, Cin, Cout, H, W = 2, 4, 8, 16, 16

    key = jax.random.PRNGKey(0)
    kx, kw, kb = jax.random.split(key, 3)

    x = jax.random.normal(kx, (N, Cin, H, W), jnp.float32)

    # Deterministic parameter init (PyTorch Conv2d-style uniform bounds).
    fan_in = Cin * K * K
    bound = 1.0 / np.sqrt(fan_in)
    w = jax.random.uniform(kw, (Cout, Cin, K, K), jnp.float32, -bound, bound)
    b = jax.random.uniform(kb, (Cout,), jnp.float32, -bound, bound)
    gamma = jnp.ones((Cout,), jnp.float32)   # BatchNorm2d default weight
    beta = jnp.zeros((Cout,), jnp.float32)   # BatchNorm2d default bias

    # Hoisted parameter prep (once per weight update), then the fused kernel.
    prepared = prepare_conv5x5_params(w, b, gamma, beta, W)
    out = conv5x5_apply(x, *prepared)
    jax.block_until_ready(out)

    ref = conv5x5_reference(x, w, b, gamma, beta)
    # bf16 matmul operands (f32 accumulation / stats) -> slightly looser tol.
    np.testing.assert_allclose(np.asarray(out), np.asarray(ref),
                               rtol=3e-2, atol=3e-2)

    print("KERNEL_OK")
</pallas_src>

<mosaic_0001>
module attributes {stable_mosaic.version = 11 : i64} {
  func.func @_fused_conv_bn_relu_kernel(%arg0: i32, %arg1: memref<32x320xbf16, #tpu.memory_space<vmem>>, %arg2: memref<320x128xbf16, #tpu.memory_space<vmem>>, %arg3: memref<128x128xf32, #tpu.memory_space<vmem>>, %arg4: memref<1x128xf32, #tpu.memory_space<vmem>>, %arg5: memref<1x128xf32, #tpu.memory_space<vmem>>, %arg6: memref<32x128xf32, #tpu.memory_space<vmem>>) attributes {dimension_semantics = [#tpu.dimension_semantics<arbitrary>], iteration_bounds = array<i64: 1>, scalar_prefetch = 0 : i64, scratch_operands = 0 : i64, tpu.core_type = #tpu.core_type<tc>, window_params = [{pipeline_mode = #tpu.pipeline_mode<synchronous>, transform_indices = @transform_0, window_bounds = array<i64: 32, 320>}, {pipeline_mode = #tpu.pipeline_mode<synchronous>, transform_indices = @transform_1, window_bounds = array<i64: 320, 128>}, {pipeline_mode = #tpu.pipeline_mode<synchronous>, transform_indices = @transform_2, window_bounds = array<i64: 128, 128>}, {pipeline_mode = #tpu.pipeline_mode<synchronous>, transform_indices = @transform_3, window_bounds = array<i64: 1, 128>}, {pipeline_mode = #tpu.pipeline_mode<synchronous>, transform_indices = @transform_4, window_bounds = array<i64: 1, 128>}, {pipeline_mode = #tpu.pipeline_mode<synchronous>, transform_indices = @transform_5, window_bounds = array<i64: 32, 128>}]} {
    %c0 = arith.constant 0 : index
    %c0_0 = arith.constant 0 : index
    %0 = vector.load %arg1[%c0, %c0_0] : memref<32x320xbf16, #tpu.memory_space<vmem>>, vector<32x320xbf16>
    %c0_1 = arith.constant 0 : index
    %c0_2 = arith.constant 0 : index
    %1 = vector.load %arg2[%c0_1, %c0_2] : memref<320x128xbf16, #tpu.memory_space<vmem>>, vector<320x128xbf16>
    %cst = arith.constant dense<0.000000e+00> : vector<32x128xf32>
    %2 = tpu.matmul %0, %1, %cst {dimension_numbers = #tpu.dot_dimension_numbers<[1], [0], [0], [1], [0, 0, 1, 1], [], []>} : vector<32x320xbf16>, vector<320x128xbf16>, vector<32x128xf32> -> vector<32x128xf32>
    %cst_3 = arith.constant dense<0.000000e+00> : vector<128xf32>
    %3 = vector.multi_reduction <add>, %2, %cst_3 [0] : vector<32x128xf32> to vector<128xf32>
    %4 = vector.shape_cast %3 : vector<128xf32> to vector<1x128xf32>
    %c0_4 = arith.constant 0 : index
    %c0_5 = arith.constant 0 : index
    %5 = vector.load %arg3[%c0_4, %c0_5] : memref<128x128xf32, #tpu.memory_space<vmem>>, vector<128x128xf32>
    %cst_6 = arith.constant dense<0.000000e+00> : vector<1x128xf32>
    %6 = tpu.matmul %4, %5, %cst_6 {dimension_numbers = #tpu.dot_dimension_numbers<[1], [0], [0], [1], [0, 0, 1, 1], [], []>} : vector<1x128xf32>, vector<128x128xf32>, vector<1x128xf32> -> vector<1x128xf32>
    %cst_7 = arith.constant 0.001953125 : f32
    %7 = vector.broadcast %cst_7 : f32 to vector<1x128xf32>
    %8 = arith.mulf %6, %7 : vector<1x128xf32>
    %9 = vector.broadcast %8 : vector<1x128xf32> to vector<32x128xf32>
    %10 = arith.subf %2, %9 : vector<32x128xf32>
    %11 = arith.mulf %10, %10 : vector<32x128xf32>
    %cst_8 = arith.constant dense<0.000000e+00> : vector<128xf32>
    %12 = vector.multi_reduction <add>, %11, %cst_8 [0] : vector<32x128xf32> to vector<128xf32>
    %13 = vector.shape_cast %12 : vector<128xf32> to vector<1x128xf32>
    %c0_9 = arith.constant 0 : index
    %c0_10 = arith.constant 0 : index
    %14 = vector.load %arg3[%c0_9, %c0_10] : memref<128x128xf32, #tpu.memory_space<vmem>>, vector<128x128xf32>
    %cst_11 = arith.constant dense<0.000000e+00> : vector<1x128xf32>
    %15 = tpu.matmul %13, %14, %cst_11 {dimension_numbers = #tpu.dot_dimension_numbers<[1], [0], [0], [1], [0, 0, 1, 1], [], []>} : vector<1x128xf32>, vector<128x128xf32>, vector<1x128xf32> -> vector<1x128xf32>
    %cst_12 = arith.constant 0.001953125 : f32
    %16 = vector.broadcast %cst_12 : f32 to vector<1x128xf32>
    %17 = arith.mulf %15, %16 : vector<1x128xf32>
    %c0_13 = arith.constant 0 : index
    %c0_14 = arith.constant 0 : index
    %18 = vector.load %arg4[%c0_13, %c0_14] : memref<1x128xf32, #tpu.memory_space<vmem>>, vector<1x128xf32>
    %cst_15 = arith.constant 9.99999974E-6 : f32
    %19 = vector.broadcast %cst_15 : f32 to vector<1x128xf32>
    %20 = arith.addf %17, %19 : vector<1x128xf32>
    %21 = math.rsqrt %20 : vector<1x128xf32>
    %22 = arith.mulf %18, %21 : vector<1x128xf32>
    %23 = vector.broadcast %22 : vector<1x128xf32> to vector<32x128xf32>
    %24 = arith.mulf %10, %23 : vector<32x128xf32>
    %c0_16 = arith.constant 0 : index
    %c0_17 = arith.constant 0 : index
    %25 = vector.load %arg5[%c0_16, %c0_17] : memref<1x128xf32, #tpu.memory_space<vmem>>, vector<1x128xf32>
    %26 = vector.broadcast %25 : vector<1x128xf32> to vector<32x128xf32>
    %27 = arith.addf %24, %26 : vector<32x128xf32>
    %cst_18 = arith.constant 0.000000e+00 : f32
    %28 = vector.broadcast %cst_18 : f32 to vector<32x128xf32>
    %29 = arith.maximumf %27, %28 : vector<32x128xf32>
    %c0_19 = arith.constant 0 : index
    %c0_20 = arith.constant 0 : index
    %30 = vector.load %arg6[%c0_19, %c0_20] : memref<32x128xf32, #tpu.memory_space<vmem>>, vector<32x128xf32>
    tpu.vector_store %arg6[%c0_19, %c0_20], %29 {strides = array<i32>} : memref<32x128xf32, #tpu.memory_space<vmem>>, vector<32x128xf32>,
    return
  }
  func.func @transform_0(%arg0: i32) -> (i32, i32) {
    %c0_i32 = arith.constant 0 : i32
    %c0_i32_0 = arith.constant 0 : i32
    %c0_i32_1 = arith.constant 0 : i32
    return %c0_i32, %c0_i32_0 : i32, i32
  }
  func.func @transform_1(%arg0: i32) -> (i32, i32) {
    %c0_i32 = arith.constant 0 : i32
    %c0_i32_0 = arith.constant 0 : i32
    %c0_i32_1 = arith.constant 0 : i32
    return %c0_i32, %c0_i32_0 : i32, i32
  }
  func.func @transform_2(%arg0: i32) -> (i32, i32) {
    %c0_i32 = arith.constant 0 : i32
    %c0_i32_0 = arith.constant 0 : i32
    %c0_i32_1 = arith.constant 0 : i32
    return %c0_i32, %c0_i32_0 : i32, i32
  }
  func.func @transform_3(%arg0: i32) -> (i32, i32) {
    %c0_i32 = arith.constant 0 : i32
    %c0_i32_0 = arith.constant 0 : i32
    %c0_i32_1 = arith.constant 0 : i32
    return %c0_i32, %c0_i32_0 : i32, i32
  }
  func.func @transform_4(%arg0: i32) -> (i32, i32) {
    %c0_i32 = arith.constant 0 : i32
    %c0_i32_0 = arith.constant 0 : i32
    %c0_i32_1 = arith.constant 0 : i32
    return %c0_i32, %c0_i32_0 : i32, i32
  }
  func.func @transform_5(%arg0: i32) -> (i32, i32) {
    %c0_i32 = arith.constant 0 : i32
    %c0_i32_0 = arith.constant 0 : i32
    %c0_i32_1 = arith.constant 0 : i32
    return %c0_i32, %c0_i32_0 : i32, i32
  }
}

</mosaic_0001>

<llo_original>
// kernel: conv5x5_apply.1
$region0: #{conv5x5_apply.1}
  #allocation0 [shape = 'u32[]', space=smem, size = 0x4, offset = 0x4, fixed_abs, tag = 'smem constant byte address 0x4 - core index']
  #allocation1 [shape = 'u32[144,128]{1,0:T(1,128)}', space=vmem, size = 0x12000, scoped, tag = 'internal scratch']
  %s0 = inlined_call_operand.vmem [shape: bf16[32,320], index: 0, kind: input, shape index: {}]
  %s1 = inlined_call_operand.vmem [shape: bf16[320,128], index: 1, kind: input, shape index: {}]
  %s2 = inlined_call_operand.vmem [shape: f32[128,128], index: 2, kind: input, shape index: {}]
  %s3 = inlined_call_operand.vmem [shape: f32[1,128], index: 3, kind: input, shape index: {}]
  %s4 = inlined_call_operand.vmem [shape: f32[1,128], index: 4, kind: input, shape index: {}]
  %s5 = inlined_call_operand.vmem [shape: f32[32,128], index: 5, kind: output, shape index: {}]
  %s6 = sld [smem:[#allocation0]]
  $region30: #{conv5x5_apply.1} parent=0
    _
  %s8 = ssub.s32 1, %s6
  %s9 = scalar_select 0, %s8, %s6
  // Predicated region
  $region2: #{conv5x5_apply.1} parent=0 // pred_check
    _
  $region3: #{conv5x5_apply.1} parent=0 // pred_check_branch
    %11 = sbr.rel (0) target = $region5
  $region4: #{conv5x5_apply.1} parent=0 // pred_region
    _
  $region5: #{conv5x5_apply.1} parent=0 // pred_fallthru
    _
  // Predicated region
  $region6: #{conv5x5_apply.1} parent=0 // pred_check
    _
  $region7: #{conv5x5_apply.1} parent=0 // pred_check_branch
    %13 = sbr.rel (0) target = $region9
  $region8: #{conv5x5_apply.1} parent=0 // pred_region
    _
  $region9: #{conv5x5_apply.1} parent=0 // pred_fallthru
    _
  // Predicated region
  $region10: #{conv5x5_apply.1} parent=0 // pred_check
    _
  $region11: #{conv5x5_apply.1} parent=0 // pred_check_branch
    %15 = sbr.rel (0) target = $region13
  $region12: #{conv5x5_apply.1} parent=0 // pred_region
    _
  $region13: #{conv5x5_apply.1} parent=0 // pred_fallthru
    _
  // Predicated region
  $region14: #{conv5x5_apply.1} parent=0 // pred_check
    _
  $region15: #{conv5x5_apply.1} parent=0 // pred_check_branch
    %17 = sbr.rel (0) target = $region17
  $region16: #{conv5x5_apply.1} parent=0 // pred_region
    _
  $region17: #{conv5x5_apply.1} parent=0 // pred_fallthru
    _
  // Predicated region
  $region18: #{conv5x5_apply.1} parent=0 // pred_check
    _
  $region19: #{conv5x5_apply.1} parent=0 // pred_check_branch
    %19 = sbr.rel (0) target = $region21
  $region20: #{conv5x5_apply.1} parent=0 // pred_region
    _
  $region21: #{conv5x5_apply.1} parent=0 // pred_fallthru
    _
  %v21 = vld [vmem:[%s0] sm:$0xff]
  %v22 = vld [vmem:[%s0 + $0x8] sm:$0xf]
  %v23 = vld [vmem:[%s0 + $0xc] sm:$0xff]
  %v24 = vld [vmem:[%s0 + $0x14] sm:$0xf]
  %v25 = vld [vmem:[%s0 + $0x18] sm:$0xff]
  %v26 = vld [vmem:[%s0 + $0x20] sm:$0xf]
  %v27 = vld [vmem:[%s0 + $0x24] sm:$0xff]
  %v28 = vld [vmem:[%s0 + $0x2c] sm:$0xf]
  %v29 = vld [vmem:[%s1] sm:$0xf]
  %v30 = vld [vmem:[%s1 + $0x4] sm:$0xf]
  %v31 = vld [vmem:[%s1 + $0x8] sm:$0xf]
  %v32 = vld [vmem:[%s1 + $0xc] sm:$0xf]
  %v33 = vld [vmem:[%s1 + $0x10] sm:$0xf]
  %v34 = vld [vmem:[%s1 + $0x14] sm:$0xf]
  %v35 = vld [vmem:[%s1 + $0x18] sm:$0xf]
  %v36 = vld [vmem:[%s1 + $0x1c] sm:$0xf]
  %v37 = vld [vmem:[%s1 + $0x20] sm:$0xf]
  %v38 = vld [vmem:[%s1 + $0x24] sm:$0xf]
  %v39 = vld [vmem:[%s1 + $0x28] sm:$0xf]
  %v40 = vld [vmem:[%s1 + $0x2c] sm:$0xf]
  %v41 = vld [vmem:[%s1 + $0x30] sm:$0xf]
  %v42 = vld [vmem:[%s1 + $0x34] sm:$0xf]
  %v43 = vld [vmem:[%s1 + $0x38] sm:$0xf]
  %v44 = vld [vmem:[%s1 + $0x3c] sm:$0xf]
  %v45 = vld [vmem:[%s1 + $0x40] sm:$0xf]
  %v46 = vld [vmem:[%s1 + $0x44] sm:$0xf]
  %v47 = vld [vmem:[%s1 + $0x48] sm:$0xf]
  %v48 = vld [vmem:[%s1 + $0x4c] sm:$0xf]
  %v49 = vld [vmem:[%s1 + $0x50] sm:$0xf]
  %v50 = vld [vmem:[%s1 + $0x54] sm:$0xf]
  %v51 = vld [vmem:[%s1 + $0x58] sm:$0xf]
  %v52 = vld [vmem:[%s1 + $0x5c] sm:$0xf]
  %v53 = vld [vmem:[%s1 + $0x60] sm:$0xf]
  %v54 = vld [vmem:[%s1 + $0x64] sm:$0xf]
  %v55 = vld [vmem:[%s1 + $0x68] sm:$0xf]
  %v56 = vld [vmem:[%s1 + $0x6c] sm:$0xf]
  %v57 = vld [vmem:[%s1 + $0x70] sm:$0xf]
  %v58 = vld [vmem:[%s1 + $0x74] sm:$0xf]
  %v59 = vld [vmem:[%s1 + $0x78] sm:$0xf]
  %v60 = vld [vmem:[%s1 + $0x7c] sm:$0xf]
  %v61 = vld [vmem:[%s1 + $0x80] sm:$0xf]
  %v62 = vld [vmem:[%s1 + $0x84] sm:$0xf]
  %v63 = vld [vmem:[%s1 + $0x88] sm:$0xf]
  %v64 = vld [vmem:[%s1 + $0x8c] sm:$0xf]
  %v65 = vld [vmem:[%s1 + $0x90] sm:$0xf]
  %v66 = vld [vmem:[%s1 + $0x94] sm:$0xf]
  %v67 = vld [vmem:[%s1 + $0x98] sm:$0xf]
  %v68 = vld [vmem:[%s1 + $0x9c] sm:$0xf]
  %v77 = vunpack.c.l.b16 %v21
  %v78 = vunpack.c.h.b16 %v21
  %v79 = vunpack.c.l.b16 %v22
  %v80 = vunpack.c.l.b16 %v23
  %v81 = vunpack.c.h.b16 %v23
  %v82 = vunpack.c.l.b16 %v24
  %v83 = vunpack.c.l.b16 %v25
  %v84 = vunpack.c.h.b16 %v25
  %v85 = vunpack.c.l.b16 %v26
  %v86 = vunpack.c.l.b16 %v27
  %v87 = vunpack.c.h.b16 %v27
  %v88 = vunpack.c.l.b16 %v28
  %v89 = vpack.c.b16 %v80, %v77
  %v90 = vpack.c.b16 %v81, %v78
  %v91 = vpack.c.b16 %v82, %v79
  %v92 = vpack.c.b16 %v86, %v83
  %v93 = vpack.c.b16 %v87, %v84
  %v94 = vpack.c.b16 %v88, %v85
  %v139 = vunpack.c.l.b16 %v29
  %v140 = vunpack.c.l.b16 %v30
  %v141 = vunpack.c.l.b16 %v31
  %v142 = vunpack.c.l.b16 %v32
  %v143 = vunpack.c.l.b16 %v33
  %v144 = vunpack.c.l.b16 %v34
  %v145 = vunpack.c.l.b16 %v35
  %v146 = vunpack.c.l.b16 %v36
  %v147 = vunpack.c.l.b16 %v37
  %v148 = vunpack.c.l.b16 %v38
  %v149 = vunpack.c.l.b16 %v39
  %v150 = vunpack.c.l.b16 %v40
  %v151 = vunpack.c.l.b16 %v41
  %v152 = vunpack.c.l.b16 %v42
  %v153 = vunpack.c.l.b16 %v43
  %v154 = vunpack.c.l.b16 %v44
  %v155 = vunpack.c.l.b16 %v45
  %v156 = vunpack.c.l.b16 %v46
  %v157 = vunpack.c.l.b16 %v47
  %v158 = vunpack.c.l.b16 %v48
  %v159 = vunpack.c.l.b16 %v49
  %v160 = vunpack.c.l.b16 %v50
  %v161 = vunpack.c.l.b16 %v51
  %v162 = vunpack.c.l.b16 %v52
  %v163 = vunpack.c.l.b16 %v53
  %v164 = vunpack.c.l.b16 %v54
  %v165 = vunpack.c.l.b16 %v55
  %v166 = vunpack.c.l.b16 %v56
  %v167 = vunpack.c.l.b16 %v57
  %v168 = vunpack.c.l.b16 %v58
  %v169 = vunpack.c.l.b16 %v59
  %v170 = vunpack.c.l.b16 %v60
  %v171 = vunpack.c.l.b16 %v61
  %v172 = vunpack.c.l.b16 %v62
  %v173 = vunpack.c.l.b16 %v63
  %v174 = vunpack.c.l.b16 %v64
  %v175 = vunpack.c.l.b16 %v65
  %v176 = vunpack.c.l.b16 %v66
  %v177 = vunpack.c.l.b16 %v67
  %v178 = vunpack.c.l.b16 %v68
  %v179 = vpack.c.b16 %v140, %v139
  %v180 = vpack.c.b16 %v142, %v141
  %v181 = vpack.c.b16 %v144, %v143
  %v182 = vpack.c.b16 %v146, %v145
  %v183 = vpack.c.b16 %v148, %v147
  %v184 = vpack.c.b16 %v150, %v149
  %v185 = vpack.c.b16 %v152, %v151
  %v186 = vpack.c.b16 %v154, %v153
  %v187 = vpack.c.b16 %v156, %v155
  %v188 = vpack.c.b16 %v158, %v157
  %v189 = vpack.c.b16 %v160, %v159
  %v190 = vpack.c.b16 %v162, %v161
  %v191 = vpack.c.b16 %v164, %v163
  %v192 = vpack.c.b16 %v166, %v165
  %v193 = vpack.c.b16 %v168, %v167
  %v194 = vpack.c.b16 %v170, %v169
  %v195 = vpack.c.b16 %v172, %v171
  %v196 = vpack.c.b16 %v174, %v173
  %v197 = vpack.c.b16 %v176, %v175
  %v198 = vpack.c.b16 %v178, %v177
  %vm219 = vcmask 523264
  %v221 = vsel %vm219, %v91, 0
  %v224 = vsel %vm219, %v94, 0
  %226 = vmatprep.subr.bf16.mxu0 0
  %227 = vmatpush1.bf16.msra.mxu0 %v186
  %228 = vmatprep.subr.bf16.mxu0 0
  %229 = vmatpush1.bf16.msra.mxu0 %v185
  %230 = vmatprep.subr.bf16.mxu0 0
  %231 = vmatpush1.bf16.msra.mxu0 %v184
  %232 = vmatprep.subr.bf16.mxu0 0
  %233 = vmatpush1.bf16.msra.mxu0 %v183
  %234 = vmatprep.subr.bf16.mxu0 0
  %235 = vmatpush1.bf16.msra.mxu0 %v182
  %236 = vmatprep.subr.bf16.mxu0 0
  %237 = vmatpush1.bf16.msra.mxu0 %v181
  %238 = vmatprep.subr.bf16.mxu0 0
  %239 = vmatpush1.bf16.msra.mxu0 %v180
  %240 = vmatprep.subr.bf16.mxu0 0
  %241 = vmatpush1.bf16.msra.mxu0 %v179
  %242 = vmatprep.subr.bf16.mxu0 0
  %243 = vmatpush2.bf16.msra.mxu0 %v194
  %244 = vmatprep.subr.bf16.mxu0 0
  %245 = vmatpush2.bf16.msra.mxu0 %v193
  %246 = vmatprep.subr.bf16.mxu0 0
  %247 = vmatpush2.bf16.msra.mxu0 %v192
  %248 = vmatprep.subr.bf16.mxu0 0
  %249 = vmatpush2.bf16.msra.mxu0 %v191
  %250 = vmatprep.subr.bf16.mxu0 0
  %251 = vmatpush2.bf16.msra.mxu0 %v190
  %252 = vmatprep.subr.bf16.mxu0 0
  %253 = vmatpush2.bf16.msra.mxu0 %v189
  %254 = vmatprep.subr.bf16.mxu0 0
  %255 = vmatpush2.bf16.msra.mxu0 %v188
  %256 = vmatprep.subr.bf16.mxu0 0
  %257 = vmatpush2.bf16.msra.mxu0 %v187
  %258 = vmatprep.mubr.bf16.mxu0 %v90
  %259 = vmatmul.mubr.bf16.gmra.mxu0 %v89
  %v260 = vpop.f32.mrf.mxu0
  %v261 = vadd.f32 0.0, %v260
  %v262 = vpop.f32.mrf.mxu0
  %v263 = vpop.f32.mrf.mxu0
  %v264 = vadd.f32 0.0, %v263
  %v265 = vpop.f32.mrf.mxu0
  %266 = vmatprep.mubr.bf16.mxu0 %v93
  %267 = vmatmul.mubr.bf16.gmra.mxu0 %v92
  %v268 = vpop.f32.mrf.mxu0
  %v269 = vadd.f32 0.0, %v268
  %v270 = vpop.f32.mrf.mxu0
  %v271 = vpop.f32.mrf.mxu0
  %v272 = vadd.f32 0.0, %v271
  %v273 = vpop.f32.mrf.mxu0
  %274 = vdwg.mxu0
  %275 = vmatprep.subr.bf16.mxu0 0
  %276 = vmatpush1.bf16.msra.mxu0 0
  %277 = vmatprep.subr.bf16.mxu0 0
  %278 = vmatpush1.bf16.msra.mxu0 0
  %279 = vmatprep.subr.bf16.mxu0 0
  %280 = vmatpush1.bf16.msra.mxu0 0
  %281 = vmatprep.subr.bf16.mxu0 0
  %282 = vmatpush1.bf16.msra.mxu0 0
  %283 = vmatprep.subr.bf16.mxu0 0
  %284 = vmatpush1.bf16.msra.mxu0 %v198
  %285 = vmatprep.subr.bf16.mxu0 0
  %286 = vmatpush1.bf16.msra.mxu0 %v197
  %287 = vmatprep.subr.bf16.mxu0 0
  %288 = vmatpush1.bf16.msra.mxu0 %v196
  %289 = vmatprep.subr.bf16.mxu0 0
  %290 = vmatpush1.bf16.msra.mxu0 %v195
  %291 = vmatprep.subr.bf16.mxu0 0
  %292 = vmatpush2.bf16.msra.mxu0 0
  %293 = vmatprep.subr.bf16.mxu0 0
  %294 = vmatpush2.bf16.msra.mxu0 0
  %295 = vmatprep.subr.bf16.mxu0 0
  %296 = vmatpush2.bf16.msra.mxu0 0
  %297 = vmatprep.subr.bf16.mxu0 0
  %298 = vmatpush2.bf16.msra.mxu0 0
  %299 = vmatprep.subr.bf16.mxu0 0
  %300 = vmatpush2.bf16.msra.mxu0 0
  %301 = vmatprep.subr.bf16.mxu0 0
  %302 = vmatpush2.bf16.msra.mxu0 0
  %303 = vmatprep.subr.bf16.mxu0 0
  %304 = vmatpush2.bf16.msra.mxu0 0
  %305 = vmatprep.subr.bf16.mxu0 0
  %306 = vmatpush2.bf16.msra.mxu0 0
  %307 = vmatprep.mubr.bf16.mxu0 0
  %308 = vmatmul.mubr.bf16.gmra.mxu0 %v221
  %v309 = vpop.f32.mrf.mxu0
  %v310 = vadd.f32 %v261, %v309
  %v311 = vpop.f32.mrf.mxu0
  %v312 = vpop.f32.mrf.mxu0
  %v313 = vadd.f32 %v264, %v312
  %v314 = vpop.f32.mrf.mxu0
  %315 = vmatprep.mubr.bf16.mxu0 0
  %316 = vmatmul.mubr.bf16.gmra.mxu0 %v224
  %v317 = vpop.f32.mrf.mxu0
  %v318 = vadd.f32 %v269, %v317
  %v319 = vpop.f32.mrf.mxu0
  %v320 = vpop.f32.mrf.mxu0
  %v321 = vadd.f32 %v272, %v320
  %v322 = vpop.f32.mrf.mxu0
  %323 = vdwg.mxu0
  %v324 = vadd.f32 %v310, %v313
  %v325 = vadd.f32 %v324, %v318
  %v326 = vadd.f32 %v325, %v321
  %v327 = vrot.slane %v326, 4
  %v328 = vadd.f32 %v326, %v327
  %v329 = vrot.slane %v328, 2
  %v330 = vadd.f32 %v328, %v329
  %v331 = vrot.slane %v330, 1
  %v332 = vadd.f32 %v330, %v331
  %v333 = vld [vmem:[%s2] sm:$0xff]
  %v334 = vld [vmem:[%s2 + $0x8] sm:$0xff]
  %v335 = vld [vmem:[%s2 + $0x10] sm:$0xff]
  %v336 = vld [vmem:[%s2 + $0x18] sm:$0xff]
  %v337 = vld [vmem:[%s2 + $0x20] sm:$0xff]
  %v338 = vld [vmem:[%s2 + $0x28] sm:$0xff]
  %v339 = vld [vmem:[%s2 + $0x30] sm:$0xff]
  %v340 = vld [vmem:[%s2 + $0x38] sm:$0xff]
  %v341 = vld [vmem:[%s2 + $0x40] sm:$0xff]
  %v342 = vld [vmem:[%s2 + $0x48] sm:$0xff]
  %v343 = vld [vmem:[%s2 + $0x50] sm:$0xff]
  %v344 = vld [vmem:[%s2 + $0x58] sm:$0xff]
  %v345 = vld [vmem:[%s2 + $0x60] sm:$0xff]
  %v346 = vld [vmem:[%s2 + $0x68] sm:$0xff]
  %v347 = vld [vmem:[%s2 + $0x70] sm:$0xff]
  %v348 = vld [vmem:[%s2 + $0x78] sm:$0xff]
  %349 = vmatprep.subr.mxu0 0.0
  %350 = vmatpush1.msra.mxu0 %v348
  %351 = vmatprep.subr.mxu0 0.0
  %352 = vmatpush1.msra.mxu0 %v347
  %353 = vmatprep.subr.mxu0 0.0
  %354 = vmatpush1.msra.mxu0 %v346
  %355 = vmatprep.subr.mxu0 0.0
  %356 = vmatpush1.msra.mxu0 %v345
  %357 = vmatprep.subr.mxu0 0.0
  %358 = vmatpush1.msra.mxu0 %v344
  %359 = vmatprep.subr.mxu0 0.0
  %360 = vmatpush1.msra.mxu0 %v343
  %361 = vmatprep.subr.mxu0 0.0
  %362 = vmatpush1.msra.mxu0 %v342
  %363 = vmatprep.subr.mxu0 0.0
  %364 = vmatpush1.msra.mxu0 %v341
  %365 = vmatprep.subr.mxu0 0.0
  %366 = vmatpush1.msra.mxu0 %v340
  %367 = vmatprep.subr.mxu0 0.0
  %368 = vmatpush1.msra.mxu0 %v339
  %369 = vmatprep.subr.mxu0 0.0
  %370 = vmatpush1.msra.mxu0 %v338
  %371 = vmatprep.subr.mxu0 0.0
  %372 = vmatpush1.msra.mxu0 %v337
  %373 = vmatprep.subr.mxu0 0.0
  %374 = vmatpush1.msra.mxu0 %v336
  %375 = vmatprep.subr.mxu0 0.0
  %376 = vmatpush1.msra.mxu0 %v335
  %377 = vmatprep.subr.mxu0 0.0
  %378 = vmatpush1.msra.mxu0 %v334
  %379 = vmatprep.subr.mxu0 0.0
  %380 = vmatpush1.msra.mxu0 %v333
  %381 = vmatprep.subr.mxu0 0.0
  %382 = vmatpush2.msra.mxu0 0.0
  %383 = vmatprep.subr.mxu0 0.0
  %384 = vmatpush2.msra.mxu0 0.0
  %385 = vmatprep.subr.mxu0 0.0
  %386 = vmatpush2.msra.mxu0 0.0
  %387 = vmatprep.subr.mxu0 0.0
  %388 = vmatpush2.msra.mxu0 0.0
  %389 = vmatprep.subr.mxu0 0.0
  %390 = vmatpush2.msra.mxu0 0.0
  %391 = vmatprep.subr.mxu0 0.0
  %392 = vmatpush2.msra.mxu0 0.0
  %393 = vmatprep.subr.mxu0 0.0
  %394 = vmatpush2.msra.mxu0 0.0
  %395 = vmatprep.subr.mxu0 0.0
  %396 = vmatpush2.msra.mxu0 0.0
  %397 = vmatprep.subr.mxu0 0.0
  %398 = vmatpush2.msra.mxu0 0.0
  %399 = vmatprep.subr.mxu0 0.0
  %400 = vmatpush2.msra.mxu0 0.0
  %401 = vmatprep.subr.mxu0 0.0
  %402 = vmatpush2.msra.mxu0 0.0
  %403 = vmatprep.subr.mxu0 0.0
  %404 = vmatpush2.msra.mxu0 0.0
  %405 = vmatprep.subr.mxu0 0.0
  %406 = vmatpush2.msra.mxu0 0.0
  %407 = vmatprep.subr.mxu0 0.0
  %408 = vmatpush2.msra.mxu0 0.0
  %409 = vmatprep.subr.mxu0 0.0
  %410 = vmatpush2.msra.mxu0 0.0
  %411 = vmatprep.subr.mxu0 0.0
  %412 = vmatpush2.msra.mxu0 0.0
  %413 = vmatprep.mubr.f32.mxu0 0.0
  %414 = vmatmul.mubr.f32.gmra.mxu0 %v332
  %v415 = vpop.f32.mrf.mxu0
  %v416 = vadd.f32 0.0, %v415
  %v417 = vpop.f32.mrf.mxu0
  %418 = vdwg.mxu0
  %v419 = vmul.f32 %v416, 0.001953125
  %v420 = vlaneseq
  %v421 = vshrl.u32 %v420, 7
  %v422 = vsub.s32 0, %v421
  %v423 = vrot.slane %v419, %v422
  %v424 = vsub.f32 %v310, %v423
  %v425 = vsub.f32 %v313, %v423
  %v426 = vsub.f32 %v318, %v423
  %v427 = vsub.f32 %v321, %v423
  %v428 = vmul.f32 %v424, %v424
  %v429 = vmul.f32 %v425, %v425
  %v430 = vmul.f32 %v426, %v426
  %v431 = vmul.f32 %v427, %v427
  %v432 = vadd.f32 %v428, %v429
  %v433 = vadd.f32 %v432, %v430
  %v434 = vadd.f32 %v433, %v431
  %v435 = vrot.slane %v434, 4
  %v436 = vadd.f32 %v434, %v435
  %v437 = vrot.slane %v436, 2
  %v438 = vadd.f32 %v436, %v437
  %v439 = vrot.slane %v438, 1
  %v440 = vadd.f32 %v438, %v439
  %441 = vmatprep.subr.mxu0 0.0
  %442 = vmatpush1.msra.mxu0 %v348
  %443 = vmatprep.subr.mxu0 0.0
  %444 = vmatpush1.msra.mxu0 %v347
  %445 = vmatprep.subr.mxu0 0.0
  %446 = vmatpush1.msra.mxu0 %v346
  %447 = vmatprep.subr.mxu0 0.0
  %448 = vmatpush1.msra.mxu0 %v345
  %449 = vmatprep.subr.mxu0 0.0
  %450 = vmatpush1.msra.mxu0 %v344
  %451 = vmatprep.subr.mxu0 0.0
  %452 = vmatpush1.msra.mxu0 %v343
  %453 = vmatprep.subr.mxu0 0.0
  %454 = vmatpush1.msra.mxu0 %v342
  %455 = vmatprep.subr.mxu0 0.0
  %456 = vmatpush1.msra.mxu0 %v341
  %457 = vmatprep.subr.mxu0 0.0
  %458 = vmatpush1.msra.mxu0 %v340
  %459 = vmatprep.subr.mxu0 0.0
  %460 = vmatpush1.msra.mxu0 %v339
  %461 = vmatprep.subr.mxu0 0.0
  %462 = vmatpush1.msra.mxu0 %v338
  %463 = vmatprep.subr.mxu0 0.0
  %464 = vmatpush1.msra.mxu0 %v337
  %465 = vmatprep.subr.mxu0 0.0
  %466 = vmatpush1.msra.mxu0 %v336
  %467 = vmatprep.subr.mxu0 0.0
  %468 = vmatpush1.msra.mxu0 %v335
  %469 = vmatprep.subr.mxu0 0.0
  %470 = vmatpush1.msra.mxu0 %v334
  %471 = vmatprep.subr.mxu0 0.0
  %472 = vmatpush1.msra.mxu0 %v333
  %473 = vmatprep.subr.mxu0 0.0
  %474 = vmatpush2.msra.mxu0 0.0
  %475 = vmatprep.subr.mxu0 0.0
  %476 = vmatpush2.msra.mxu0 0.0
  %477 = vmatprep.subr.mxu0 0.0
  %478 = vmatpush2.msra.mxu0 0.0
  %479 = vmatprep.subr.mxu0 0.0
  %480 = vmatpush2.msra.mxu0 0.0
  %481 = vmatprep.subr.mxu0 0.0
  %482 = vmatpush2.msra.mxu0 0.0
  %483 = vmatprep.subr.mxu0 0.0
  %484 = vmatpush2.msra.mxu0 0.0
  %485 = vmatprep.subr.mxu0 0.0
  %486 = vmatpush2.msra.mxu0 0.0
  %487 = vmatprep.subr.mxu0 0.0
  %488 = vmatpush2.msra.mxu0 0.0
  %489 = vmatprep.subr.mxu0 0.0
  %490 = vmatpush2.msra.mxu0 0.0
  %491 = vmatprep.subr.mxu0 0.0
  %492 = vmatpush2.msra.mxu0 0.0
  %493 = vmatprep.subr.mxu0 0.0
  %494 = vmatpush2.msra.mxu0 0.0
  %495 = vmatprep.subr.mxu0 0.0
  %496 = vmatpush2.msra.mxu0 0.0
  %497 = vmatprep.subr.mxu0 0.0
  %498 = vmatpush2.msra.mxu0 0.0
  %499 = vmatprep.subr.mxu0 0.0
  %500 = vmatpush2.msra.mxu0 0.0
  %501 = vmatprep.subr.mxu0 0.0
  %502 = vmatpush2.msra.mxu0 0.0
  %503 = vmatprep.subr.mxu0 0.0
  %504 = vmatpush2.msra.mxu0 0.0
  %505 = vmatprep.mubr.f32.mxu0 0.0
  %506 = vmatmul.mubr.f32.gmra.mxu0 %v440
  %v507 = vpop.f32.mrf.mxu0
  %v508 = vadd.f32 0.0, %v507
  %v509 = vpop.f32.mrf.mxu0
  %510 = vdwg.mxu0
  %v511 = vmul.f32 %v508, 0.001953125
  %v512 = vld [vmem:[%s3] sm:$0x1]
  %v513 = vadd.f32 %v511, 1e-05
  %v514 = vrsqrt.pop %v513
  %v515 = vmul.f32 %v512, %v514
  %v517 = vlaneseq
  %v518 = vshrl.u32 %v517, 7
  %v519 = vsub.s32 0, %v518
  %v520 = vrot.slane %v515, %v519
  %v522 = vmul.f32 %v424, %v520
  %v523 = vmul.f32 %v425, %v520
  %v524 = vmul.f32 %v426, %v520
  %v525 = vmul.f32 %v427, %v520
  %v526 = vld [vmem:[%s4] sm:$0x1]
  %v528 = vlaneseq
  %v529 = vshrl.u32 %v528, 7
  %v530 = vsub.s32 0, %v529
  %v531 = vrot.slane %v526, %v530
  %v533 = vadd.f32 %v522, %v531
  %v534 = vadd.f32 %v523, %v531
  %v535 = vadd.f32 %v524, %v531
  %v536 = vadd.f32 %v525, %v531
  %v537 = vmax.f32 %v533, 0.0
  %v538 = vmax.f32 %v534, 0.0
  %v539 = vmax.f32 %v535, 0.0
  %v540 = vmax.f32 %v536, 0.0
  %541 = vst [vmem:[%s5] sm:$0xff] %v537
  %542 = vst [vmem:[%s5 + $0x8] sm:$0xff] %v538
  %543 = vst [vmem:[%s5 + $0x10] sm:$0xff] %v539
  %544 = vst [vmem:[%s5 + $0x18] sm:$0xff] %v540
  // Predicated region
  $region22: #{conv5x5_apply.1} parent=0 // pred_check
    _
  $region23: #{conv5x5_apply.1} parent=0 // pred_check_branch
    %546 = sbr.rel (0) target = $region25
  $region24: #{conv5x5_apply.1} parent=0 // pred_region
    _
  $region25: #{conv5x5_apply.1} parent=0 // pred_fallthru
    _
  // Predicated region
  $region26: #{conv5x5_apply.1} parent=0 // pred_check
    _
  $region27: #{conv5x5_apply.1} parent=0 // pred_check_branch
    %548 = sbr.rel (0) target = $region29
  $region28: #{conv5x5_apply.1} parent=0 // pred_region
    _
  $region29: #{conv5x5_apply.1} parent=0 // pred_fallthru
    _

</llo_original>
